<compile_context>
chip_gen: v7x
topology: tpu7x:2x2x1
jax: 0.10.0
libtpu: 0.0.40
codegen_flags: <defaults>
</compile_context>

<pallas_src>
import jax
import jax.numpy as jnp
from jax.experimental import pallas as pl
from jax.experimental.pallas import tpu as pltpu


def conv1x1_kernel(w_ref, b_ref, x_ref, o_ref):
    """Pointwise conv over channels, spatial pixels on the (sublane, lane) plane.

    w_ref: (Cout, Cin)        f32, SMEM (scalars)
    b_ref: (Cout,)            f32, SMEM (scalars)
    x_ref: (1, Cin,  ts, 128) f32, VMEM
    o_ref: (1, Cout, ts, 128) f32, VMEM
    """
    cout, cin = w_ref.shape
    ts = x_ref.shape[2]

    # Hoist all scalar SMEM reads (weight rows, bias) above the vector math.
    w = [[w_ref[co, ci] for ci in range(cin)] for co in range(cout)]
    b = [b_ref[co] for co in range(cout)]

    # Strip-mine the sublane (row) axis so the Cin input planes plus one
    # accumulator stay inside the 64-vreg file per strip (no VMEM spills of
    # the chained accumulator). Strip is a multiple of 8 sublanes.
    strip = max(8, 8 * (48 // (cin + 1)))
    strip = min(strip, ts)

    for s0 in range(0, ts, strip):
        sz = min(strip, ts - s0)
        # Load each input plane strip exactly once; reuse across all Cout
        # (Cin vld streams per strip instead of Cout*Cin).
        xs = [x_ref[0, ci, s0:s0 + sz, :] for ci in range(cin)]
        for co in range(cout):
            # Bias folded into the first term: one fewer full-strip VALU pass.
            acc = w[co][0] * xs[0] + b[co]
            for ci in range(1, cin):
                acc = acc + w[co][ci] * xs[ci]
            o_ref[0, co, s0:s0 + sz, :] = acc.astype(o_ref.dtype)


def cord_out_conv(x, weight, bias, *, ts_target=1024):
    """Equivalent of cord_OutConv.forward (Conv3d, kernel_size=1).

    x:      (N, C_in, D, H, W)  float32
    weight: (C_out, C_in)       (Conv3d weight squeezed over the 1x1x1 dims)
    bias:   (C_out,)
    returns (N, C_out, D, H, W)
    """
    N, Cin, D, H, W = x.shape
    Cout = weight.shape[0]
    S = D * H * W

    # Contiguous reshape — no transpose, no extra HBM pass.
    xf = x.reshape(N, Cin, S)

    # Pad the spatial tail up to a lane multiple only if needed (rare path).
    S_pad = ((S + 127) // 128) * 128
    if S_pad != S:
        xf = jnp.pad(xf, ((0, 0), (0, 0), (0, S_pad - S)))
    S128 = S_pad // 128
    xr = xf.reshape(N, Cin, S128, 128)   # contiguous reshape (free)

    # Spatial tile size from a VMEM budget: double-buffered block cost is
    # 2*(Cin+Cout)*ts*512 B. 12 MiB fits every chip's scoped-VMEM default
    # (v5e 16 MiB, v6e/v7x 32 MiB); ts > ~1024 buys no extra HBM bandwidth.
    vmem_budget = 12 * 1024 * 1024
    ts_cap = max(8, vmem_budget // (2 * (Cin + Cout) * 128 * 4))
    ts = min(ts_target, ts_cap, S128)
    if ts < S128:
        ts = max(8, (ts // 8) * 8)
    grid_s = pl.cdiv(S128, ts)

    out = pl.pallas_call(
        conv1x1_kernel,
        out_shape=jax.ShapeDtypeStruct((N, Cout, S128, 128), x.dtype),
        grid=(N, grid_s),
        in_specs=[
            pl.BlockSpec(memory_space=pltpu.MemorySpace.SMEM),   # weight
            pl.BlockSpec(memory_space=pltpu.MemorySpace.SMEM),   # bias
            pl.BlockSpec((1, Cin, ts, 128), lambda n, s: (n, 0, s, 0)),
        ],
        out_specs=pl.BlockSpec((1, Cout, ts, 128), lambda n, s: (n, 0, s, 0)),
        compiler_params=pltpu.CompilerParams(
            dimension_semantics=("parallel", "parallel")),
    )(weight, bias, xr)

    out = out.reshape(N, Cout, S_pad)
    if S_pad != S:
        out = out[:, :, :S]
    return out.reshape(N, Cout, D, H, W)


if __name__ == "__main__":
    key = jax.random.PRNGKey(0)
    kx, kw = jax.random.split(key)

    # Module config (synthetic, deterministic init mirroring __init__):
    in_channels, out_channels = 4, 3
    N, D, H, W = 2, 4, 8, 8

    x = jax.random.normal(kx, (N, in_channels, D, H, W), dtype=jnp.float32)

    # nn.init.uniform_(conv.weight) -> U[0, 1); conv.bias = 0.
    # Conv3d weight shape is (C_out, C_in, 1, 1, 1); we keep the squeezed (C_out, C_in).
    weight = jax.random.uniform(kw, (out_channels, in_channels), dtype=jnp.float32)
    bias = jnp.zeros((out_channels,), dtype=jnp.float32)

    out = cord_out_conv(x, weight, bias)
    out = jax.block_until_ready(out)

    # Reference check in plain JAX (einsum over channel axis).
    ref = jnp.einsum("ncdhw,oc->nodhw", x, weight) + bias[None, :, None, None, None]
    assert out.shape == (N, out_channels, D, H, W)
    assert jnp.allclose(out, ref, atol=1e-5, rtol=1e-5)

    print("KERNEL_OK")
</pallas_src>

<mosaic_0001>
module attributes {stable_mosaic.version = 11 : i64} {
  func.func @conv1x1_kernel(%arg0: i32, %arg1: i32, %arg2: memref<3x4xf32, #tpu.memory_space<smem>>, %arg3: memref<3xf32, #tpu.memory_space<smem>>, %arg4: memref<1x4x2x128xf32, #tpu.memory_space<vmem>>, %arg5: memref<1x3x2x128xf32, #tpu.memory_space<vmem>>) attributes {dimension_semantics = [#tpu.dimension_semantics<parallel>, #tpu.dimension_semantics<parallel>], iteration_bounds = array<i64: 2, 1>, scalar_prefetch = 0 : i64, scratch_operands = 0 : i64, tpu.core_type = #tpu.core_type<tc>, window_params = [{transform_indices = @transform_0, window_bounds = array<i64: 3, 4>}, {transform_indices = @transform_1, window_bounds = array<i64: 3>}, {transform_indices = @transform_2, window_bounds = array<i64: 1, 4, 2, 128>}, {transform_indices = @transform_3, window_bounds = array<i64: 1, 3, 2, 128>}]} {
    %c0 = arith.constant 0 : index
    %c0_0 = arith.constant 0 : index
    %0 = memref.load %arg2[%c0, %c0_0] : memref<3x4xf32, #tpu.memory_space<smem>>
    %c0_1 = arith.constant 0 : index
    %c1 = arith.constant 1 : index
    %1 = memref.load %arg2[%c0_1, %c1] : memref<3x4xf32, #tpu.memory_space<smem>>
    %c0_2 = arith.constant 0 : index
    %c2 = arith.constant 2 : index
    %2 = memref.load %arg2[%c0_2, %c2] : memref<3x4xf32, #tpu.memory_space<smem>>
    %c0_3 = arith.constant 0 : index
    %c3 = arith.constant 3 : index
    %3 = memref.load %arg2[%c0_3, %c3] : memref<3x4xf32, #tpu.memory_space<smem>>
    %c1_4 = arith.constant 1 : index
    %c0_5 = arith.constant 0 : index
    %4 = memref.load %arg2[%c1_4, %c0_5] : memref<3x4xf32, #tpu.memory_space<smem>>
    %c1_6 = arith.constant 1 : index
    %c1_7 = arith.constant 1 : index
    %5 = memref.load %arg2[%c1_6, %c1_7] : memref<3x4xf32, #tpu.memory_space<smem>>
    %c1_8 = arith.constant 1 : index
    %c2_9 = arith.constant 2 : index
    %6 = memref.load %arg2[%c1_8, %c2_9] : memref<3x4xf32, #tpu.memory_space<smem>>
    %c1_10 = arith.constant 1 : index
    %c3_11 = arith.constant 3 : index
    %7 = memref.load %arg2[%c1_10, %c3_11] : memref<3x4xf32, #tpu.memory_space<smem>>
    %c2_12 = arith.constant 2 : index
    %c0_13 = arith.constant 0 : index
    %8 = memref.load %arg2[%c2_12, %c0_13] : memref<3x4xf32, #tpu.memory_space<smem>>
    %c2_14 = arith.constant 2 : index
    %c1_15 = arith.constant 1 : index
    %9 = memref.load %arg2[%c2_14, %c1_15] : memref<3x4xf32, #tpu.memory_space<smem>>
    %c2_16 = arith.constant 2 : index
    %c2_17 = arith.constant 2 : index
    %10 = memref.load %arg2[%c2_16, %c2_17] : memref<3x4xf32, #tpu.memory_space<smem>>
    %c2_18 = arith.constant 2 : index
    %c3_19 = arith.constant 3 : index
    %11 = memref.load %arg2[%c2_18, %c3_19] : memref<3x4xf32, #tpu.memory_space<smem>>
    %c0_20 = arith.constant 0 : index
    %12 = memref.load %arg3[%c0_20] : memref<3xf32, #tpu.memory_space<smem>>
    %c1_21 = arith.constant 1 : index
    %13 = memref.load %arg3[%c1_21] : memref<3xf32, #tpu.memory_space<smem>>
    %c2_22 = arith.constant 2 : index
    %14 = memref.load %arg3[%c2_22] : memref<3xf32, #tpu.memory_space<smem>>
    %c0_23 = arith.constant 0 : index
    %c0_24 = arith.constant 0 : index
    %c0_25 = arith.constant 0 : index
    %c0_26 = arith.constant 0 : index
    %15 = vector.load %arg4[%c0_23, %c0_24, %c0_25, %c0_26] : memref<1x4x2x128xf32, #tpu.memory_space<vmem>>, vector<1x1x2x128xf32>
    %16 = vector.shape_cast %15 : vector<1x1x2x128xf32> to vector<2x128xf32>
    %c0_27 = arith.constant 0 : index
    %c1_28 = arith.constant 1 : index
    %c0_29 = arith.constant 0 : index
    %c0_30 = arith.constant 0 : index
    %17 = vector.load %arg4[%c0_27, %c1_28, %c0_29, %c0_30] : memref<1x4x2x128xf32, #tpu.memory_space<vmem>>, vector<1x1x2x128xf32>
    %18 = vector.shape_cast %17 : vector<1x1x2x128xf32> to vector<2x128xf32>
    %c0_31 = arith.constant 0 : index
    %c2_32 = arith.constant 2 : index
    %c0_33 = arith.constant 0 : index
    %c0_34 = arith.constant 0 : index
    %19 = vector.load %arg4[%c0_31, %c2_32, %c0_33, %c0_34] : memref<1x4x2x128xf32, #tpu.memory_space<vmem>>, vector<1x1x2x128xf32>
    %20 = vector.shape_cast %19 : vector<1x1x2x128xf32> to vector<2x128xf32>
    %c0_35 = arith.constant 0 : index
    %c3_36 = arith.constant 3 : index
    %c0_37 = arith.constant 0 : index
    %c0_38 = arith.constant 0 : index
    %21 = vector.load %arg4[%c0_35, %c3_36, %c0_37, %c0_38] : memref<1x4x2x128xf32, #tpu.memory_space<vmem>>, vector<1x1x2x128xf32>
    %22 = vector.shape_cast %21 : vector<1x1x2x128xf32> to vector<2x128xf32>
    %23 = vector.broadcast %0 : f32 to vector<2x128xf32>
    %24 = arith.mulf %23, %16 : vector<2x128xf32>
    %25 = vector.broadcast %12 : f32 to vector<2x128xf32>
    %26 = arith.addf %24, %25 : vector<2x128xf32>
    %27 = vector.broadcast %1 : f32 to vector<2x128xf32>
    %28 = arith.mulf %27, %18 : vector<2x128xf32>
    %29 = arith.addf %26, %28 : vector<2x128xf32>
    %30 = vector.broadcast %2 : f32 to vector<2x128xf32>
    %31 = arith.mulf %30, %20 : vector<2x128xf32>
    %32 = arith.addf %29, %31 : vector<2x128xf32>
    %33 = vector.broadcast %3 : f32 to vector<2x128xf32>
    %34 = arith.mulf %33, %22 : vector<2x128xf32>
    %35 = arith.addf %32, %34 : vector<2x128xf32>
    %c0_39 = arith.constant 0 : index
    %c0_40 = arith.constant 0 : index
    %c0_41 = arith.constant 0 : index
    %c0_42 = arith.constant 0 : index
    %36 = vector.load %arg5[%c0_39, %c0_40, %c0_41, %c0_42] : memref<1x3x2x128xf32, #tpu.memory_space<vmem>>, vector<1x1x2x128xf32>
    %37 = vector.shape_cast %36 : vector<1x1x2x128xf32> to vector<2x128xf32>
    %38 = vector.shape_cast %35 : vector<2x128xf32> to vector<1x1x2x128xf32>
    tpu.vector_store %arg5[%c0_39, %c0_40, %c0_41, %c0_42], %38 {strides = array<i32>} : memref<1x3x2x128xf32, #tpu.memory_space<vmem>>, vector<1x1x2x128xf32>,
    %39 = vector.broadcast %4 : f32 to vector<2x128xf32>
    %40 = arith.mulf %39, %16 : vector<2x128xf32>
    %41 = vector.broadcast %13 : f32 to vector<2x128xf32>
    %42 = arith.addf %40, %41 : vector<2x128xf32>
    %43 = vector.broadcast %5 : f32 to vector<2x128xf32>
    %44 = arith.mulf %43, %18 : vector<2x128xf32>
    %45 = arith.addf %42, %44 : vector<2x128xf32>
    %46 = vector.broadcast %6 : f32 to vector<2x128xf32>
    %47 = arith.mulf %46, %20 : vector<2x128xf32>
    %48 = arith.addf %45, %47 : vector<2x128xf32>
    %49 = vector.broadcast %7 : f32 to vector<2x128xf32>
    %50 = arith.mulf %49, %22 : vector<2x128xf32>
    %51 = arith.addf %48, %50 : vector<2x128xf32>
    %c0_43 = arith.constant 0 : index
    %c1_44 = arith.constant 1 : index
    %c0_45 = arith.constant 0 : index
    %c0_46 = arith.constant 0 : index
    %52 = vector.load %arg5[%c0_43, %c1_44, %c0_45, %c0_46] : memref<1x3x2x128xf32, #tpu.memory_space<vmem>>, vector<1x1x2x128xf32>
    %53 = vector.shape_cast %52 : vector<1x1x2x128xf32> to vector<2x128xf32>
    %54 = vector.shape_cast %51 : vector<2x128xf32> to vector<1x1x2x128xf32>
    tpu.vector_store %arg5[%c0_43, %c1_44, %c0_45, %c0_46], %54 {strides = array<i32>} : memref<1x3x2x128xf32, #tpu.memory_space<vmem>>, vector<1x1x2x128xf32>,
    %55 = vector.broadcast %8 : f32 to vector<2x128xf32>
    %56 = arith.mulf %55, %16 : vector<2x128xf32>
    %57 = vector.broadcast %14 : f32 to vector<2x128xf32>
    %58 = arith.addf %56, %57 : vector<2x128xf32>
    %59 = vector.broadcast %9 : f32 to vector<2x128xf32>
    %60 = arith.mulf %59, %18 : vector<2x128xf32>
    %61 = arith.addf %58, %60 : vector<2x128xf32>
    %62 = vector.broadcast %10 : f32 to vector<2x128xf32>
    %63 = arith.mulf %62, %20 : vector<2x128xf32>
    %64 = arith.addf %61, %63 : vector<2x128xf32>
    %65 = vector.broadcast %11 : f32 to vector<2x128xf32>
    %66 = arith.mulf %65, %22 : vector<2x128xf32>
    %67 = arith.addf %64, %66 : vector<2x128xf32>
    %c0_47 = arith.constant 0 : index
    %c2_48 = arith.constant 2 : index
    %c0_49 = arith.constant 0 : index
    %c0_50 = arith.constant 0 : index
    %68 = vector.load %arg5[%c0_47, %c2_48, %c0_49, %c0_50] : memref<1x3x2x128xf32, #tpu.memory_space<vmem>>, vector<1x1x2x128xf32>
    %69 = vector.shape_cast %68 : vector<1x1x2x128xf32> to vector<2x128xf32>
    %70 = vector.shape_cast %67 : vector<2x128xf32> to vector<1x1x2x128xf32>
    tpu.vector_store %arg5[%c0_47, %c2_48, %c0_49, %c0_50], %70 {strides = array<i32>} : memref<1x3x2x128xf32, #tpu.memory_space<vmem>>, vector<1x1x2x128xf32>,
    return
  }
  func.func @transform_0(%arg0: i32, %arg1: i32) -> (i32, i32) {
    %c0_i32 = arith.constant 0 : i32
    %c0_i32_0 = arith.constant 0 : i32
    %c0_i32_1 = arith.constant 0 : i32
    return %c0_i32, %c0_i32_0 : i32, i32
  }
  func.func @transform_1(%arg0: i32, %arg1: i32) -> i32 {
    %c0_i32 = arith.constant 0 : i32
    %c0_i32_0 = arith.constant 0 : i32
    return %c0_i32 : i32
  }
  func.func @transform_2(%arg0: i32, %arg1: i32) -> (i32, i32, i32, i32) {
    %c0_i32 = arith.constant 0 : i32
    %c0_i32_0 = arith.constant 0 : i32
    %c0_i32_1 = arith.constant 0 : i32
    return %arg0, %c0_i32, %arg1, %c0_i32_0 : i32, i32, i32, i32
  }
  func.func @transform_3(%arg0: i32, %arg1: i32) -> (i32, i32, i32, i32) {
    %c0_i32 = arith.constant 0 : i32
    %c0_i32_0 = arith.constant 0 : i32
    %c0_i32_1 = arith.constant 0 : i32
    return %arg0, %c0_i32, %arg1, %c0_i32_0 : i32, i32, i32, i32
  }
}

</mosaic_0001>

<llo_original>
// kernel: tpu_custom_call.1
$region0: #{tpu_custom_call.1}
  #allocation0 [shape = 'u32[]', space=smem, size = 0x4, offset = 0x4, fixed_abs, tag = 'smem constant byte address 0x4 - core index']
  #allocation1 [shape = 'u32[144,128]{1,0:T(1,128)}', space=vmem, size = 0x12000, scoped, tag = 'internal scratch']
  %s0 = inlined_call_operand.hbm [shape: f32[3,4], index: 0, kind: input, shape index: {}]
  %s1 = inlined_call_operand.vmem [shape: f32[3], index: 1, kind: input, shape index: {}]
  %s2 = inlined_call_operand.hbm [shape: f32[2,4,2,128], index: 2, kind: input, shape index: {}]
  %s3 = inlined_call_operand.hbm [shape: f32[2,3,2,128], index: 3, kind: output, shape index: {}]
  %s4 = sld [smem:[#allocation0]]
  $region57: #{tpu_custom_call.1} parent=0
    _
  %s6 = ssub.s32 1, %s4
  %s7 = scalar_select 0, %s6, %s4
  $region1: #{tpu_custom_call.1} parent=0
    #allocation2 [shape = 'u8[2048]{0}', space=smem, size = 0x800, scoped, tag = 'input window, operand 0, single buffered']
    #allocation3 [shape = 's32[2]{0}', space=sflag, size = 0x8, scoped, tag = 'scoped memory for tpu_custom_call.1']
    #allocation4 [shape = 's32[2]{0}', space=sflag, size = 0x8, scoped, tag = 'scoped memory for tpu_custom_call.1']
    #allocation5 [shape = 's32[2]{0}', space=sflag, size = 0x8, scoped, tag = 'scoped memory for tpu_custom_call.1']
    #allocation6 [shape = 's32[2]{0}', space=sflag, size = 0x8, scoped, tag = 'scoped memory for tpu_custom_call.1']
    #allocation7 [shape = 'u8[512]{0}', space=smem, size = 0x200, scoped, tag = 'input window, operand 1, single buffered']
    #allocation8 [shape = 'u8[8192]{0}', space=vmem, size = 0x2000, scoped, tag = 'input window, operand 2']
    #allocation9 [shape = 'u8[6144]{0}', space=vmem, size = 0x1800, scoped, tag = 'output window, operand 0']
    %8 = vsyncpa [#allocation5], 0
    %9 = vsyncpa [#allocation6], 0
    %10 = vsyncpa [#allocation3], 0
    %s11 = scalar_lea.sflag [#allocation3], 1
    %12 = vsyncpa %s11, 0
    %13 = vsyncpa [#allocation4], 0
    %s14 = scalar_lea.sflag [#allocation4], 1
    %15 = vsyncpa %s14, 0
    loop: start=0, step=1, limit=4
    $region2: #{tpu_custom_call.1} parent=1 // loop_pre_header
      _
    $region3: #{tpu_custom_call.1} parent=1 // loop_header
      %s17 = sphi 0, %s21
      %p18 = scmp.ge.s32.totalorder %s17, 4
      %s24 = sphi 0, %s36
      %s25 = sphi 0, %s32
      %s26 = sphi 0, %s24
      %s27 = sphi 0, %s25
      %s28 = sphi 0, %s26
      %s29 = sphi 0, %s27
      %s37 = sphi 0, %s37
      %s39 = sphi 0, %s37
      %s40 = sphi 0, %s39
      %s54 = sphi 0, %s40
      %s58 = sphi 0, %s58
      %s60 = sphi 0, %s58
      %s61 = sphi 0, %s60
      %s75 = sphi 0, %s61
      %s83 = sphi 0, %s85
      %s86 = sphi 0, %s83
      %s87 = sphi 0, %s86
      %s103 = sphi 0, %s87
      %s111 = sphi 0, %s113
      %s114 = sphi 0, %s111
      %s115 = sphi 0, %s114
      %s131 = sphi 0, %s115
    $region4: #{tpu_custom_call.1} parent=1 // loop_header_branch
      %20 = sbr.rel (%p18) target = $region8
    $region5: #{tpu_custom_call.1} parent=1 // loop_body
      %s22 = ssub.s32 %s17, 1
      %s23 = ssub.s32 %s17, 2
      %s30 = sadd.s32 1, %s25
      %p31 = scmp.ge.s32.totalorder %s30, 1
      %s32 = scalar_select %p31, 0, %s30
      %s33 = sadd.s32 1, %s24
      %s34 = scalar_select %p31, %s33, %s24
      %p35 = scmp.ge.s32.totalorder %s34, 2
      %s36 = scalar_select %p35, 0, %s34
      %s38 = sadd.s32 %s37, 1
      %p41 = scmp.eq.s32.totalorder %s17, 1
      %p42 = scmp.ne.s32.totalorder %s37, %s39
      %p43 = scmp.eq.s32.totalorder %s17, 0
      %p44 = por %p42, %p43
      %p45 = scmp.ne.s32.totalorder %s37, %s39
      %p46 = scmp.eq.s32.totalorder %s22, 1
      %p47 = por %p45, %p46
      %p48 = scmp.ne.s32.totalorder %s39, %s40
      %p49 = scmp.eq.s32.totalorder %s22, 0
      %p50 = por %p48, %p49
      %p51 = scmp.ne.s32.totalorder %s39, %s40
      %p52 = scmp.eq.s32.totalorder %s23, 1
      %p53 = por %p51, %p52
      %p55 = scmp.ne.s32.totalorder %s40, %s54
      %p56 = scmp.eq.s32.totalorder %s23, 0
      %p57 = por %p55, %p56
      %s59 = sadd.s32 %s58, 1
      %p62 = scmp.eq.s32.totalorder %s17, 1
      %p63 = scmp.ne.s32.totalorder %s58, %s60
      %p64 = scmp.eq.s32.totalorder %s17, 0
      %p65 = por %p63, %p64
      %p66 = scmp.ne.s32.totalorder %s58, %s60
      %p67 = scmp.eq.s32.totalorder %s22, 1
      %p68 = por %p66, %p67
      %p69 = scmp.ne.s32.totalorder %s60, %s61
      %p70 = scmp.eq.s32.totalorder %s22, 0
      %p71 = por %p69, %p70
      %p72 = scmp.ne.s32.totalorder %s60, %s61
      %p73 = scmp.eq.s32.totalorder %s23, 1
      %p74 = por %p72, %p73
      %p76 = scmp.ne.s32.totalorder %s61, %s75
      %p77 = scmp.eq.s32.totalorder %s23, 0
      %p78 = por %p76, %p77
      %s79 = ssub.s32 %s24, %s36
      %s80 = ssub.s32 %s25, %s32
      %s81 = sor.u32 %s79, %s80
      %p82 = scmp.eq.s32.totalorder %s81, 0
      %s84 = sadd.s32 %s83, 1
      %s85 = scalar_select %p82, %s83, %s84
      %p88 = pneg %p82
      %p89 = scmp.eq.s32.totalorder %s17, 1
      %p90 = por %p88, %p89
      %p91 = scmp.ne.s32.totalorder %s83, %s86
      %p92 = scmp.eq.s32.totalorder %s17, 0
      %p93 = por %p91, %p92
      %p94 = scmp.ne.s32.totalorder %s83, %s86
      %p95 = scmp.eq.s32.totalorder %s22, 1
      %p96 = por %p94, %p95
      %p97 = scmp.ne.s32.totalorder %s86, %s87
      %p98 = scmp.eq.s32.totalorder %s22, 0
      %p99 = por %p97, %p98
      %p100 = scmp.ne.s32.totalorder %s86, %s87
      %p101 = scmp.eq.s32.totalorder %s23, 1
      %p102 = por %p100, %p101
      %p104 = scmp.ne.s32.totalorder %s87, %s103
      %p105 = scmp.eq.s32.totalorder %s23, 0
      %p106 = por %p104, %p105
      %s107 = ssub.s32 %s24, %s36
      %s108 = ssub.s32 %s25, %s32
      %s109 = sor.u32 %s107, %s108
      %p110 = scmp.eq.s32.totalorder %s109, 0
      %s112 = sadd.s32 %s111, 1
      %s113 = scalar_select %p110, %s111, %s112
      %p116 = pneg %p110
      %p117 = scmp.eq.s32.totalorder %s17, 1
      %p118 = por %p116, %p117
      %p119 = scmp.ne.s32.totalorder %s111, %s114
      %p120 = scmp.eq.s32.totalorder %s17, 0
      %p121 = por %p119, %p120
      %p122 = scmp.ne.s32.totalorder %s111, %s114
      %p123 = scmp.eq.s32.totalorder %s22, 1
      %p124 = por %p122, %p123
      %p125 = scmp.ne.s32.totalorder %s114, %s115
      %p126 = scmp.eq.s32.totalorder %s22, 0
      %p127 = por %p125, %p126
      %p128 = scmp.ne.s32.totalorder %s114, %s115
      %p129 = scmp.eq.s32.totalorder %s23, 1
      %p130 = por %p128, %p129
      %p132 = scmp.ne.s32.totalorder %s115, %s131
      %p133 = scmp.eq.s32.totalorder %s23, 0
      %p134 = por %p132, %p133
      %p135 = scmp.le.s32.totalorder 1, %s17
      %p136 = scmp.lt.s32.totalorder %s17, 3
      %p137 = pnand %p135, %p136
      %p138 = pneg %p137
      // Predicated region
      $region9: #{tpu_custom_call.1} parent=5 // pred_check
        _
      $region10: #{tpu_custom_call.1} parent=5 // pred_check_branch
        %140 = sbr.rel (%p137) target = $region12
      $region11: #{tpu_custom_call.1} parent=5 // pred_region
        %s141 = ssub.s32 %s17, 1
        // Predicated region
        $region13: #{tpu_custom_call.1} parent=11 // pred_check
          %p142 = pneg %p50
        $region14: #{tpu_custom_call.1} parent=11 // pred_check_branch
          %144 = sbr.rel (%p142) target = $region16
        $region15: #{tpu_custom_call.1} parent=11 // pred_region
          %s146 = ssub.s32 64, 64
          %147 = vsyncadd [#allocation5], %s146
          %150 = dma.hbm_to_smem %s0, 64, [#allocation2], [#allocation5]
        $region16: #{tpu_custom_call.1} parent=11 // pred_fallthru
          _
        // Predicated region
        $region17: #{tpu_custom_call.1} parent=11 // pred_check
          %p151 = pneg %p71
        $region18: #{tpu_custom_call.1} parent=11 // pred_check_branch
          %153 = sbr.rel (%p151) target = $region20
        $region19: #{tpu_custom_call.1} parent=11 // pred_region
          %s155 = ssub.s32 16, 16
          %156 = vsyncadd [#allocation6], %s155
          %s158 = sshll.u32 %s1, 4
          %s159 = int_to_ptr.vmem [resolvable:$true] %s158
          %161 = dma.vmem_to_smem %s159, 16, [#allocation7], [#allocation6]
        $region20: #{tpu_custom_call.1} parent=11 // pred_fallthru
          _
      $region12: #{tpu_custom_call.1} parent=5 // pred_fallthru
        _
      %p162 = scmp.lt.s32.totalorder %s17, 2
      // Predicated region
      $region21: #{tpu_custom_call.1} parent=5 // pred_check
        %p163 = pneg %p162
      $region22: #{tpu_custom_call.1} parent=5 // pred_check_branch
        %165 = sbr.rel (%p163) target = $region24
      $region23: #{tpu_custom_call.1} parent=5 // pred_region
        // Predicated region
        $region25: #{tpu_custom_call.1} parent=23 // pred_check
          %p166 = pneg %p93
        $region26: #{tpu_custom_call.1} parent=23 // pred_check_branch
          %168 = sbr.rel (%p166) target = $region28
        $region27: #{tpu_custom_call.1} parent=23 // pred_region
          %s169 = sand.u32 %s83, 1
          %s170 = scalar_lea.sflag [#allocation3], %s169
          %s171 = sand.u32 %s83, 1
          %s172 = smul.addr %s171, 8
          %s173 = scalar_lea.vmem [#allocation8], %s172
          %s175 = ssub.s32 128, 128
          %176 = vsyncadd %s170, %s175
          %s177 = smul.addr %s24, 4
          %s178 = sadd.s32 %s25, %s177
          %s179 = smul.addr %s178, 32
          %s180 = scalar_lea.hbm %s2, %s179
          %s181 = sshll.u32 %s173, 4
          %s182 = int_to_ptr.vmem [resolvable:$true] %s181
          %187 = dma.hbm_to_vmem [thread:$0]  %s180, 128, %s182, %s170, 32, 32, 2
        $region28: #{tpu_custom_call.1} parent=23 // pred_fallthru
          _
      $region24: #{tpu_custom_call.1} parent=5 // pred_fallthru
        _
      %p188 = scmp.le.s32.totalorder 1, %s17
      %p189 = scmp.lt.s32.totalorder %s17, 3
      %p190 = pnand %p188, %p189
      %p191 = pneg %p190
      // Predicated region
      $region29: #{tpu_custom_call.1} parent=5 // pred_check
        _
      $region30: #{tpu_custom_call.1} parent=5 // pred_check_branch
        %193 = sbr.rel (%p190) target = $region32
      $region31: #{tpu_custom_call.1} parent=5 // pred_region
        %s194 = ssub.s32 %s17, 1
        // Predicated region
        $region33: #{tpu_custom_call.1} parent=31 // pred_check
          %p195 = pneg %p50
        $region34: #{tpu_custom_call.1} parent=31 // pred_check_branch
          %197 = sbr.rel (%p195) target = $region36
        $region35: #{tpu_custom_call.1} parent=31 // pred_region
          %198 = dma.done [#allocation5], 64
        $region36: #{tpu_custom_call.1} parent=31 // pred_fallthru
          _
        // Predicated region
        $region37: #{tpu_custom_call.1} parent=31 // pred_check
          %p199 = pneg %p71
        $region38: #{tpu_custom_call.1} parent=31 // pred_check_branch
          %201 = sbr.rel (%p199) target = $region40
        $region39: #{tpu_custom_call.1} parent=31 // pred_region
          %202 = dma.done [#allocation6], 16
        $region40: #{tpu_custom_call.1} parent=31 // pred_fallthru
          _
        %s203 = sand.u32 %s86, 1
        %s204 = scalar_lea.sflag [#allocation3], %s203
        %s205 = sand.u32 %s86, 1
        %s206 = smul.addr %s205, 8
        %s207 = scalar_lea.vmem [#allocation8], %s206
        // Predicated region
        $region41: #{tpu_custom_call.1} parent=31 // pred_check
          %p208 = pneg %p99
        $region42: #{tpu_custom_call.1} parent=31 // pred_check_branch
          %210 = sbr.rel (%p208) target = $region44
        $region43: #{tpu_custom_call.1} parent=31 // pred_region
          %211 = dma.done %s204, 128
        $region44: #{tpu_custom_call.1} parent=31 // pred_fallthru
          _
        %212 = sfence
        %p213 = pneg %p50
        %p214 = pneg %p47
        %p215 = pneg %p71
        %p216 = pneg %p68
        %s217 = sand.u32 %s86, 1
        %s218 = scalar_lea.sflag [#allocation3], %s217
        %s219 = sand.u32 %s86, 1
        %s220 = smul.addr %s219, 8
        %s221 = scalar_lea.vmem [#allocation8], %s220
        %p222 = pneg %p99
        %p223 = pneg %p96
        %p224 = pneg %p127
        %p225 = pneg %p124
        %s226 = sand.u32 %s114, 1
        %s227 = scalar_lea.sflag [#allocation4], %s226
        %s228 = sand.u32 %s114, 1
        %s229 = smul.addr %s228, 6
        %s230 = scalar_lea.vmem [#allocation9], %s229
        %s231 = sld [smem:[#allocation2]]
        %s232 = sld [smem:[#allocation2 + $0x1]]
        %s233 = sld [smem:[#allocation2 + $0x2]]
        %s234 = sld [smem:[#allocation2 + $0x3]]
        %s235 = sld [smem:[#allocation2 + $0x80]]
        %s236 = sld [smem:[#allocation2 + $0x81]]
        %s237 = sld [smem:[#allocation2 + $0x82]]
        %s238 = sld [smem:[#allocation2 + $0x83]]
        %s239 = sld [smem:[#allocation2 + $0x100]]
        %s240 = sld [smem:[#allocation2 + $0x101]]
        %s241 = sld [smem:[#allocation2 + $0x102]]
        %s242 = sld [smem:[#allocation2 + $0x103]]
        %s243 = sld [smem:[#allocation7]]
        %s244 = sld [smem:[#allocation7 + $0x1]]
        %s245 = sld [smem:[#allocation7 + $0x2]]
        %v246 = vld [vmem:[%s207] sm:$0x3]
        %s247 = scalar_lea.vmem %s207, 2 [#allocation8]
        %v248 = vld [vmem:[%s247] sm:$0x3]
        %s249 = scalar_lea.vmem %s207, 4 [#allocation8]
        %v250 = vld [vmem:[%s249] sm:$0x3]
        %s251 = scalar_lea.vmem %s207, 6 [#allocation8]
        %v252 = vld [vmem:[%s251] sm:$0x3]
        %v253 = vstv %s231
        %v254 = vmul.f32 %v253, %v246
        %v255 = vstv %s243
        %v256 = vadd.f32 %v254, %v255
        %v257 = vstv %s232
        %v258 = vmul.f32 %v257, %v248
        %v259 = vadd.f32 %v256, %v258
        %v260 = vstv %s233
        %v261 = vmul.f32 %v260, %v250
        %v262 = vadd.f32 %v259, %v261
        %v263 = vstv %s234
        %v264 = vmul.f32 %v263, %v252
        %v265 = vadd.f32 %v262, %v264
        %266 = vst [vmem:[%s230] sm:$0x3] %v265
        %v267 = vstv %s235
        %v268 = vmul.f32 %v267, %v246
        %v269 = vstv %s244
        %v270 = vadd.f32 %v268, %v269
        %v271 = vstv %s236
        %v272 = vmul.f32 %v271, %v248
        %v273 = vadd.f32 %v270, %v272
        %v274 = vstv %s237
        %v275 = vmul.f32 %v274, %v250
        %v276 = vadd.f32 %v273, %v275
        %v277 = vstv %s238
        %v278 = vmul.f32 %v277, %v252
        %v279 = vadd.f32 %v276, %v278
        %s280 = scalar_lea.vmem %s230, 2 [#allocation9]
        %281 = vst [vmem:[%s280] sm:$0x3] %v279
        %v282 = vstv %s239
        %v283 = vmul.f32 %v282, %v246
        %v284 = vstv %s245
        %v285 = vadd.f32 %v283, %v284
        %v286 = vstv %s240
        %v287 = vmul.f32 %v286, %v248
        %v288 = vadd.f32 %v285, %v287
        %v289 = vstv %s241
        %v290 = vmul.f32 %v289, %v250
        %v291 = vadd.f32 %v288, %v290
        %v292 = vstv %s242
        %v293 = vmul.f32 %v292, %v252
        %v294 = vadd.f32 %v291, %v293
        %s295 = scalar_lea.vmem %s230, 4 [#allocation9]
        %296 = vst [vmem:[%s295] sm:$0x3] %v294
        %s297 = sand.u32 %s114, 1
        %s298 = scalar_lea.sflag [#allocation4], %s297
        %s299 = sand.u32 %s114, 1
        %s300 = smul.addr %s299, 6
        %s301 = scalar_lea.vmem [#allocation9], %s300
        // Predicated region
        $region45: #{tpu_custom_call.1} parent=31 // pred_check
          %p302 = pneg %p124
        $region46: #{tpu_custom_call.1} parent=31 // pred_check_branch
          %304 = sbr.rel (%p302) target = $region48
        $region47: #{tpu_custom_call.1} parent=31 // pred_region
          %s306 = ssub.s32 96, 96
          %307 = vsyncadd %s298, %s306
          %s308 = smul.addr %s26, 3
          %s309 = sadd.s32 %s27, %s308
          %s310 = smul.addr %s309, 32
          %s311 = scalar_lea.hbm %s3, %s310
          %s312 = sshll.u32 %s301, 4
          %s313 = int_to_ptr.vmem [resolvable:$true] %s312
          %318 = dma.vmem_to_hbm [thread:$0]  %s313, 96, %s311, %s298, 32, 32, 2
        $region48: #{tpu_custom_call.1} parent=31 // pred_fallthru
          _
      $region32: #{tpu_custom_call.1} parent=5 // pred_fallthru
        _
      %p319 = scmp.le.s32.totalorder 2, %s17
      // Predicated region
      $region49: #{tpu_custom_call.1} parent=5 // pred_check
        %p320 = pneg %p319
      $region50: #{tpu_custom_call.1} parent=5 // pred_check_branch
        %322 = sbr.rel (%p320) target = $region52
      $region51: #{tpu_custom_call.1} parent=5 // pred_region
        %s323 = ssub.s32 %s17, 2
        // Predicated region
        $region53: #{tpu_custom_call.1} parent=51 // pred_check
          %p324 = pneg %p130
        $region54: #{tpu_custom_call.1} parent=51 // pred_check_branch
          %326 = sbr.rel (%p324) target = $region56
        $region55: #{tpu_custom_call.1} parent=51 // pred_region
          %s327 = sand.u32 %s115, 1
          %s328 = scalar_lea.sflag [#allocation4], %s327
          %s329 = sand.u32 %s115, 1
          %s330 = smul.addr %s329, 6
          %s331 = scalar_lea.vmem [#allocation9], %s330
          %332 = dma.done %s328, 96
        $region56: #{tpu_custom_call.1} parent=51 // pred_fallthru
          _
      $region52: #{tpu_custom_call.1} parent=5 // pred_fallthru
        _
    $region6: #{tpu_custom_call.1} parent=1 // loop_footer
      %s21 = sadd.s32 1, %s17
    $region7: #{tpu_custom_call.1} parent=1 // loop_footer_branch
      %16 = sbr.rel target = $region3
    $region8: #{tpu_custom_call.1} parent=1 // loop_exit
      _
    %333 = vsyncpa [#allocation3], 1
    %s334 = scalar_lea.sflag [#allocation3], 1
    %335 = vsyncpa %s334, 1
    %336 = vsyncpa [#allocation4], 1
    %s337 = scalar_lea.sflag [#allocation4], 1
    %338 = vsyncpa %s337, 1
    %339 = vsyncpa [#allocation5], 1
    %s340 = scalar_lea.sflag [#allocation5], 1
    %341 = vsyncpa %s340, 1
    %342 = vsyncpa [#allocation6], 1
    %s343 = scalar_lea.sflag [#allocation6], 1
    %344 = vsyncpa %s343, 1

</llo_original>
